<compile_context>
chip_gen: v7x
topology: tpu7x:2x2x1
jax: 0.10.0
libtpu: 0.0.40
codegen_flags: <defaults>
</compile_context>

<pallas_src>
import jax
import jax.numpy as jnp
from jax.experimental import pallas as pl
from jax.experimental.pallas import tpu as pltpu


def linear_logits_kernel(x_ref, w_ref, b_ref, z_ref):
    """One batch tile of z = x @ W^T + b for nn.Linear(D, 1).

    x_ref: (TB, D) VMEM   batch tile of inputs (f32 or bf16)
    w_ref: (1, D)  f32 VMEM   nn.Linear weight in its native, lane-dense layout
    b_ref: (1,)    f32 SMEM   nn.Linear bias (scalar)
    z_ref: (1, TB) f32 VMEM   logits with batch on the lane axis (lane-dense)
    """
    # Upcast after the (possibly bf16) load: HBM traffic is halved for bf16
    # callers while the multiply/reduce stays f32 (required on v5e).
    x = x_ref[...].astype(jnp.float32)                     # (TB, D)
    w = w_ref[...]                                         # (1, D), broadcast over sublanes
    # VPU multiply + lane-axis reduce: with a single output feature the MXU
    # would be a 1-column matvec, so we keep the MXU path entirely free.
    z_col = jnp.sum(x * w, axis=1, keepdims=True) + b_ref[0]   # (TB, 1)
    # Lane-dense store: batch on lanes -> unmasked vst instead of TB/8 masked
    # partial stores.  The tiny (TB,1)->(1,TB) relayout rides the idle XLU.
    z_ref[...] = z_col.T                                   # (1, TB)


def _pick_batch_tile(batch, d, itemsize, block_rows):
    """D-/VMEM-aware batch tile; multiple of 128 when tiling (lane-dense out block)."""
    if block_rows is None:
        # Double-buffered x stream is ~2*tb*d*itemsize bytes.  12 MiB stays well
        # under the scoped-VMEM defaults (16 MiB v5e, 32 MiB v6e, 32-of-64 MiB v7x).
        budget = 12 * 1024 * 1024
        rows = budget // max(1, 2 * d * itemsize)
        rows = min(max(rows, 128), 2048)       # >=512-row tiles ~ 85% of HBM roofline
        # Keep >= 2 grid steps when the batch allows it so the "parallel" axis
        # has something to shard across v7x's 2 TensorCores.
        if batch > 256:
            rows = min(rows, max(128, (pl.cdiv(batch, 2) // 128) * 128))
        tb = min(batch, rows)
    else:
        tb = min(block_rows, batch)
    if tb < batch:
        # Lane-dense output blocks need the lane dim to be a multiple of 128
        # (and the x block's sublane dim a multiple of 8) when tiling.
        tb = (tb // 128) * 128
        if tb < 128:
            tb = min(batch, 128)
    return tb


def linear_logits_pallas(x, weight, bias, *, block_rows=None):
    """z = x @ W^T + b for nn.Linear(D, 1). Returns (B, 1) f32 logits.

    x:      (B, D) float32 or bfloat16
    weight: (1, D) float32 (PyTorch nn.Linear layout, used as-is)
    bias:   (1,)   float32
    """
    batch, d = x.shape
    assert weight.shape == (1, d)
    weight = weight.astype(jnp.float32)
    bias = jnp.asarray(bias, jnp.float32).reshape(1)

    tb = _pick_batch_tile(batch, d, x.dtype.itemsize, block_rows)
    grid = (pl.cdiv(batch, tb),)
    # Partial final tiles are fine: the reduce is within-row (no accumulation
    # across padded rows) and Pallas masks the output writeback to valid lanes.

    z_row = pl.pallas_call(
        linear_logits_kernel,
        out_shape=jax.ShapeDtypeStruct((1, batch), jnp.float32),
        grid=grid,
        in_specs=[
            pl.BlockSpec((tb, d), lambda i: (i, 0)),               # x tile
            pl.BlockSpec((1, d), lambda i: (0, 0)),                # weight (lane-dense)
            pl.BlockSpec(memory_space=pltpu.MemorySpace.SMEM),     # bias scalar
        ],
        out_specs=pl.BlockSpec((1, tb), lambda i: (0, i)),         # lane-dense logits
        compiler_params=pltpu.CompilerParams(
            dimension_semantics=("parallel",),   # batch tiles are independent
        ),
    )(x, weight, bias)
    # (1, B) -> (B, 1): contiguous reshape in the wrapper (layout plumbing only).
    return z_row.reshape(batch, 1)


def torch_model_forward(x, weight, bias, y=None, *, skip_unused_compute=True,
                        block_rows=None):
    """Replicates TorchModel.forward.

    With a single output class, softmax(dim=1) is identically 1.0 and
    CrossEntropyLoss(softmax_output, y) is identically 0.0 for finite inputs,
    so the default path returns those constants with zero HBM traffic (per the
    perf review).  NOTE: PyTorch would propagate NaN for non-finite logits; set
    skip_unused_compute=False for the kernel-backed, NaN-faithful path.
    """
    batch = x.shape[0]
    if skip_unused_compute:
        if y is None:
            return jnp.ones((batch, 1), jnp.float32)
        return jnp.zeros((), jnp.float32)

    logits = linear_logits_pallas(x, weight, bias, block_rows=block_rows)
    y_pred = jax.nn.softmax(logits, axis=1)                    # (B, 1)
    if y is None:
        return y_pred
    # Faithful to the original (CrossEntropyLoss applied to an already-softmaxed
    # tensor) — degenerate for C=1, kept as cheap plain-JAX glue.
    log_probs = jax.nn.log_softmax(y_pred, axis=1)
    picked = jnp.take_along_axis(log_probs, y.reshape(-1, 1).astype(jnp.int32), axis=1)
    return -jnp.mean(picked)


if __name__ == "__main__":
    B, INPUT_SIZE = 256, 32

    key = jax.random.PRNGKey(0)
    kx, kw, kb = jax.random.split(key, 3)

    # Deterministic PyTorch-style init: uniform(-1/sqrt(D), 1/sqrt(D)).
    bound = 1.0 / (INPUT_SIZE ** 0.5)
    weight = jax.random.uniform(kw, (1, INPUT_SIZE), jnp.float32, -bound, bound)
    bias = jax.random.uniform(kb, (1,), jnp.float32, -bound, bound)
    x = jax.random.normal(kx, (B, INPUT_SIZE), jnp.float32)

    # Elementwise reference (avoids any MXU-precision ambiguity).
    z_expect = jnp.sum(x * weight, axis=1, keepdims=True) + bias      # (B, 1)

    # 1) Default call: D-/VMEM-aware tile picking (single tile at this size).
    logits = jax.block_until_ready(linear_logits_pallas(x, weight, bias))
    assert logits.shape == (B, 1)
    assert jnp.allclose(logits, z_expect, atol=1e-4, rtol=1e-4), "linear output mismatch"

    # 2) Gridded pipeline: 128-row tiles -> 2 grid steps (lane-dense out blocks).
    logits_tiled = jax.block_until_ready(
        linear_logits_pallas(x, weight, bias, block_rows=128))
    assert jnp.allclose(logits_tiled, z_expect, atol=1e-4, rtol=1e-4), "tiled mismatch"

    # 3) bf16 input-streaming path (math stays f32 in-kernel).
    x_bf16 = x.astype(jnp.bfloat16)
    z_expect_bf16 = jnp.sum(x_bf16.astype(jnp.float32) * weight, axis=1,
                            keepdims=True) + bias
    logits_bf16 = jax.block_until_ready(linear_logits_pallas(x_bf16, weight, bias))
    assert jnp.allclose(logits_bf16, z_expect_bf16, atol=1e-3, rtol=1e-3), "bf16 mismatch"

    # 4) Module-level forward: constant fast path and kernel-backed faithful path.
    y_pred = jax.block_until_ready(torch_model_forward(x, weight, bias))
    assert y_pred.shape == (B, 1) and bool(jnp.all(y_pred == 1.0))
    y_pred_full = jax.block_until_ready(
        torch_model_forward(x, weight, bias, skip_unused_compute=False))
    assert jnp.allclose(y_pred_full, jax.nn.softmax(z_expect, axis=1), atol=1e-6)

    # 5) Loss path: single class -> loss is exactly 0 on both paths.
    y = jnp.zeros((B,), jnp.int32)
    loss = jax.block_until_ready(torch_model_forward(x, weight, bias, y))
    loss_full = jax.block_until_ready(
        torch_model_forward(x, weight, bias, y, skip_unused_compute=False))
    assert loss.shape == () and bool(loss == 0.0)
    assert jnp.allclose(loss_full, 0.0, atol=1e-6)

    print("KERNEL_OK")
</pallas_src>

<mosaic_0001>
module attributes {stable_mosaic.version = 11 : i64} {
  func.func @linear_logits_kernel(%arg0: i32, %arg1: memref<256x32xf32, #tpu.memory_space<vmem>>, %arg2: memref<1x32xf32, #tpu.memory_space<vmem>>, %arg3: memref<1xf32, #tpu.memory_space<smem>>, %arg4: memref<1x256xf32, #tpu.memory_space<vmem>>) attributes {dimension_semantics = [#tpu.dimension_semantics<parallel>], iteration_bounds = array<i64: 1>, scalar_prefetch = 0 : i64, scratch_operands = 0 : i64, tpu.core_type = #tpu.core_type<tc>, window_params = [{transform_indices = @transform_0, window_bounds = array<i64: 256, 32>}, {pipeline_mode = #tpu.pipeline_mode<synchronous>, transform_indices = @transform_1, window_bounds = array<i64: 1, 32>}, {transform_indices = @transform_2, window_bounds = array<i64: 1>}, {transform_indices = @transform_3, window_bounds = array<i64: 1, 256>}]} {
    %c0 = arith.constant 0 : index
    %c0_0 = arith.constant 0 : index
    %0 = vector.load %arg1[%c0, %c0_0] : memref<256x32xf32, #tpu.memory_space<vmem>>, vector<256x32xf32>
    %c0_1 = arith.constant 0 : index
    %c0_2 = arith.constant 0 : index
    %1 = vector.load %arg2[%c0_1, %c0_2] : memref<1x32xf32, #tpu.memory_space<vmem>>, vector<1x32xf32>
    %2 = vector.broadcast %1 : vector<1x32xf32> to vector<256x32xf32>
    %3 = arith.mulf %0, %2 : vector<256x32xf32>
    %cst = arith.constant dense<0.000000e+00> : vector<256xf32>
    %4 = vector.multi_reduction <add>, %3, %cst [1] : vector<256x32xf32> to vector<256xf32>
    %5 = vector.shape_cast %4 : vector<256xf32> to vector<256x1xf32>
    %c0_3 = arith.constant 0 : index
    %6 = memref.load %arg3[%c0_3] : memref<1xf32, #tpu.memory_space<smem>>
    %7 = vector.broadcast %6 : f32 to vector<256x1xf32>
    %8 = arith.addf %5, %7 : vector<256x1xf32>
    %9 = tpu.transpose %8, [1, 0] : vector<256x1xf32> -> vector<1x256xf32>
    %c0_4 = arith.constant 0 : index
    %c0_5 = arith.constant 0 : index
    %10 = vector.load %arg4[%c0_4, %c0_5] : memref<1x256xf32, #tpu.memory_space<vmem>>, vector<1x256xf32>
    tpu.vector_store %arg4[%c0_4, %c0_5], %9 {strides = array<i32>} : memref<1x256xf32, #tpu.memory_space<vmem>>, vector<1x256xf32>,
    return
  }
  func.func @transform_0(%arg0: i32) -> (i32, i32) {
    %c0_i32 = arith.constant 0 : i32
    %c0_i32_0 = arith.constant 0 : i32
    return %arg0, %c0_i32 : i32, i32
  }
  func.func @transform_1(%arg0: i32) -> (i32, i32) {
    %c0_i32 = arith.constant 0 : i32
    %c0_i32_0 = arith.constant 0 : i32
    %c0_i32_1 = arith.constant 0 : i32
    return %c0_i32, %c0_i32_0 : i32, i32
  }
  func.func @transform_2(%arg0: i32) -> i32 {
    %c0_i32 = arith.constant 0 : i32
    %c0_i32_0 = arith.constant 0 : i32
    return %c0_i32 : i32
  }
  func.func @transform_3(%arg0: i32) -> (i32, i32) {
    %c0_i32 = arith.constant 0 : i32
    %c0_i32_0 = arith.constant 0 : i32
    return %c0_i32, %arg0 : i32, i32
  }
}

</mosaic_0001>

<llo_original>
// kernel: tpu_custom_call.1
$region0: #{tpu_custom_call.1}
  #allocation0 [shape = 'u32[]', space=smem, size = 0x4, offset = 0x4, fixed_abs, tag = 'smem constant byte address 0x4 - core index']
  #allocation1 [shape = 'u32[144,128]{1,0:T(1,128)}', space=vmem, size = 0x12000, scoped, tag = 'internal scratch']
  #allocation2 [shape = 'f32[1]{0:T(128)S(6)}', space=smem, size = 0x200, scoped, tag = 'scoped memory for tpu_custom_call.1']
  %s0 = inlined_call_operand.vmem [shape: f32[256,32], index: 0, kind: input, shape index: {}]
  %s1 = inlined_call_operand.vmem [shape: f32[1,32], index: 1, kind: input, shape index: {}]
  %s2 = inlined_call_operand.<no memory space> [shape: f32[1], index: 2, kind: input, shape index: {}]
  %s3 = inlined_call_operand.hbm [shape: f32[1,256], index: 3, kind: output, shape index: {}]
  %s4 = sld [smem:[#allocation0]]
  $region22: #{tpu_custom_call.1} parent=0
    _
  %s6 = ssub.s32 1, %s4
  %s7 = scalar_select 0, %s6, %s4
  %8 = sst [smem:[#allocation2]] %s2
  $region1: #{tpu_custom_call.1} parent=0
    #allocation3 [shape = 'u8[1024]{0}', space=vmem, size = 0x400, scoped, tag = 'output window, operand 0, single buffered']
    #allocation4 [shape = 's32[1]{0}', space=sflag, size = 0x4, scoped, tag = 'scoped memory for tpu_custom_call.1']
    %9 = vsyncpa [#allocation4], 0
    // Predicated region
    $region2: #{tpu_custom_call.1} parent=1 // pred_check
      _
    $region3: #{tpu_custom_call.1} parent=1 // pred_check_branch
      %11 = sbr.rel (0) target = $region5
    $region4: #{tpu_custom_call.1} parent=1 // pred_region
      _
    $region5: #{tpu_custom_call.1} parent=1 // pred_fallthru
      _
    // Predicated region
    $region6: #{tpu_custom_call.1} parent=1 // pred_check
      _
    $region7: #{tpu_custom_call.1} parent=1 // pred_check_branch
      %13 = sbr.rel (0) target = $region9
    $region8: #{tpu_custom_call.1} parent=1 // pred_region
      _
    $region9: #{tpu_custom_call.1} parent=1 // pred_fallthru
      _
    // Predicated region
    $region10: #{tpu_custom_call.1} parent=1 // pred_check
      _
    $region11: #{tpu_custom_call.1} parent=1 // pred_check_branch
      %15 = sbr.rel (0) target = $region13
    $region12: #{tpu_custom_call.1} parent=1 // pred_region
      _
    $region13: #{tpu_custom_call.1} parent=1 // pred_fallthru
      _
    %v16 = vld [vmem:[%s0] sm:$0xff]
    %v17 = vld [vmem:[%s0 + $0x8] sm:$0xff]
    %v18 = vld [vmem:[%s0 + $0x10] sm:$0xff]
    %v19 = vld [vmem:[%s0 + $0x18] sm:$0xff]
    %v20 = vld [vmem:[%s0 + $0x20] sm:$0xff]
    %v21 = vld [vmem:[%s0 + $0x28] sm:$0xff]
    %v22 = vld [vmem:[%s0 + $0x30] sm:$0xff]
    %v23 = vld [vmem:[%s0 + $0x38] sm:$0xff]
    %v24 = vld [vmem:[%s0 + $0x40] sm:$0xff]
    %v25 = vld [vmem:[%s0 + $0x48] sm:$0xff]
    %v26 = vld [vmem:[%s0 + $0x50] sm:$0xff]
    %v27 = vld [vmem:[%s0 + $0x58] sm:$0xff]
    %v28 = vld [vmem:[%s0 + $0x60] sm:$0xff]
    %v29 = vld [vmem:[%s0 + $0x68] sm:$0xff]
    %v30 = vld [vmem:[%s0 + $0x70] sm:$0xff]
    %v31 = vld [vmem:[%s0 + $0x78] sm:$0xff]
    %v32 = vld [vmem:[%s0 + $0x80] sm:$0xff]
    %v33 = vld [vmem:[%s0 + $0x88] sm:$0xff]
    %v34 = vld [vmem:[%s0 + $0x90] sm:$0xff]
    %v35 = vld [vmem:[%s0 + $0x98] sm:$0xff]
    %v36 = vld [vmem:[%s0 + $0xa0] sm:$0xff]
    %v37 = vld [vmem:[%s0 + $0xa8] sm:$0xff]
    %v38 = vld [vmem:[%s0 + $0xb0] sm:$0xff]
    %v39 = vld [vmem:[%s0 + $0xb8] sm:$0xff]
    %v40 = vld [vmem:[%s0 + $0xc0] sm:$0xff]
    %v41 = vld [vmem:[%s0 + $0xc8] sm:$0xff]
    %v42 = vld [vmem:[%s0 + $0xd0] sm:$0xff]
    %v43 = vld [vmem:[%s0 + $0xd8] sm:$0xff]
    %v44 = vld [vmem:[%s0 + $0xe0] sm:$0xff]
    %v45 = vld [vmem:[%s0 + $0xe8] sm:$0xff]
    %v46 = vld [vmem:[%s0 + $0xf0] sm:$0xff]
    %v47 = vld [vmem:[%s0 + $0xf8] sm:$0xff]
    %v48 = vld [vmem:[%s1] sm:$0x1]
    %v50 = vlaneseq
    %v51 = vshrl.u32 %v50, 7
    %v52 = vsub.s32 0, %v51
    %v53 = vrot.slane %v48, %v52
    %v55 = vmul.f32 %v16, %v53
    %v56 = vmul.f32 %v17, %v53
    %v57 = vmul.f32 %v18, %v53
    %v58 = vmul.f32 %v19, %v53
    %v59 = vmul.f32 %v20, %v53
    %v60 = vmul.f32 %v21, %v53
    %v61 = vmul.f32 %v22, %v53
    %v62 = vmul.f32 %v23, %v53
    %v63 = vmul.f32 %v24, %v53
    %v64 = vmul.f32 %v25, %v53
    %v65 = vmul.f32 %v26, %v53
    %v66 = vmul.f32 %v27, %v53
    %v67 = vmul.f32 %v28, %v53
    %v68 = vmul.f32 %v29, %v53
    %v69 = vmul.f32 %v30, %v53
    %v70 = vmul.f32 %v31, %v53
    %v71 = vmul.f32 %v32, %v53
    %v72 = vmul.f32 %v33, %v53
    %v73 = vmul.f32 %v34, %v53
    %v74 = vmul.f32 %v35, %v53
    %v75 = vmul.f32 %v36, %v53
    %v76 = vmul.f32 %v37, %v53
    %v77 = vmul.f32 %v38, %v53
    %v78 = vmul.f32 %v39, %v53
    %v79 = vmul.f32 %v40, %v53
    %v80 = vmul.f32 %v41, %v53
    %v81 = vmul.f32 %v42, %v53
    %v82 = vmul.f32 %v43, %v53
    %v83 = vmul.f32 %v44, %v53
    %v84 = vmul.f32 %v45, %v53
    %v85 = vmul.f32 %v46, %v53
    %v86 = vmul.f32 %v47, %v53
    %vm87 = vcmask 261120
    %v88 = vsel %vm87, %v55, 0.0
    %89 = vadd.xlane.f32.xlu0 %v88
    %v90 = vpop.xlane.xlu0 %89
    %v91 = vsel %vm87, %v56, 0.0
    %92 = vadd.xlane.f32.xlu0 %v91
    %v93 = vpop.xlane.xlu0 %92
    %v94 = vsel %vm87, %v57, 0.0
    %95 = vadd.xlane.f32.xlu0 %v94
    %v96 = vpop.xlane.xlu0 %95
    %v97 = vsel %vm87, %v58, 0.0
    %98 = vadd.xlane.f32.xlu0 %v97
    %v99 = vpop.xlane.xlu0 %98
    %v100 = vsel %vm87, %v59, 0.0
    %101 = vadd.xlane.f32.xlu0 %v100
    %v102 = vpop.xlane.xlu0 %101
    %v103 = vsel %vm87, %v60, 0.0
    %104 = vadd.xlane.f32.xlu0 %v103
    %v105 = vpop.xlane.xlu0 %104
    %v106 = vsel %vm87, %v61, 0.0
    %107 = vadd.xlane.f32.xlu0 %v106
    %v108 = vpop.xlane.xlu0 %107
    %v109 = vsel %vm87, %v62, 0.0
    %110 = vadd.xlane.f32.xlu0 %v109
    %v111 = vpop.xlane.xlu0 %110
    %v112 = vsel %vm87, %v63, 0.0
    %113 = vadd.xlane.f32.xlu0 %v112
    %v114 = vpop.xlane.xlu0 %113
    %v115 = vsel %vm87, %v64, 0.0
    %116 = vadd.xlane.f32.xlu0 %v115
    %v117 = vpop.xlane.xlu0 %116
    %v118 = vsel %vm87, %v65, 0.0
    %119 = vadd.xlane.f32.xlu0 %v118
    %v120 = vpop.xlane.xlu0 %119
    %v121 = vsel %vm87, %v66, 0.0
    %122 = vadd.xlane.f32.xlu0 %v121
    %v123 = vpop.xlane.xlu0 %122
    %v124 = vsel %vm87, %v67, 0.0
    %125 = vadd.xlane.f32.xlu0 %v124
    %v126 = vpop.xlane.xlu0 %125
    %v127 = vsel %vm87, %v68, 0.0
    %128 = vadd.xlane.f32.xlu0 %v127
    %v129 = vpop.xlane.xlu0 %128
    %v130 = vsel %vm87, %v69, 0.0
    %131 = vadd.xlane.f32.xlu0 %v130
    %v132 = vpop.xlane.xlu0 %131
    %v133 = vsel %vm87, %v70, 0.0
    %134 = vadd.xlane.f32.xlu0 %v133
    %v135 = vpop.xlane.xlu0 %134
    %v136 = vsel %vm87, %v71, 0.0
    %137 = vadd.xlane.f32.xlu0 %v136
    %v138 = vpop.xlane.xlu0 %137
    %v139 = vsel %vm87, %v72, 0.0
    %140 = vadd.xlane.f32.xlu0 %v139
    %v141 = vpop.xlane.xlu0 %140
    %v142 = vsel %vm87, %v73, 0.0
    %143 = vadd.xlane.f32.xlu0 %v142
    %v144 = vpop.xlane.xlu0 %143
    %v145 = vsel %vm87, %v74, 0.0
    %146 = vadd.xlane.f32.xlu0 %v145
    %v147 = vpop.xlane.xlu0 %146
    %v148 = vsel %vm87, %v75, 0.0
    %149 = vadd.xlane.f32.xlu0 %v148
    %v150 = vpop.xlane.xlu0 %149
    %v151 = vsel %vm87, %v76, 0.0
    %152 = vadd.xlane.f32.xlu0 %v151
    %v153 = vpop.xlane.xlu0 %152
    %v154 = vsel %vm87, %v77, 0.0
    %155 = vadd.xlane.f32.xlu0 %v154
    %v156 = vpop.xlane.xlu0 %155
    %v157 = vsel %vm87, %v78, 0.0
    %158 = vadd.xlane.f32.xlu0 %v157
    %v159 = vpop.xlane.xlu0 %158
    %v160 = vsel %vm87, %v79, 0.0
    %161 = vadd.xlane.f32.xlu0 %v160
    %v162 = vpop.xlane.xlu0 %161
    %v163 = vsel %vm87, %v80, 0.0
    %164 = vadd.xlane.f32.xlu0 %v163
    %v165 = vpop.xlane.xlu0 %164
    %v166 = vsel %vm87, %v81, 0.0
    %167 = vadd.xlane.f32.xlu0 %v166
    %v168 = vpop.xlane.xlu0 %167
    %v169 = vsel %vm87, %v82, 0.0
    %170 = vadd.xlane.f32.xlu0 %v169
    %v171 = vpop.xlane.xlu0 %170
    %v172 = vsel %vm87, %v83, 0.0
    %173 = vadd.xlane.f32.xlu0 %v172
    %v174 = vpop.xlane.xlu0 %173
    %v175 = vsel %vm87, %v84, 0.0
    %176 = vadd.xlane.f32.xlu0 %v175
    %v177 = vpop.xlane.xlu0 %176
    %v178 = vsel %vm87, %v85, 0.0
    %179 = vadd.xlane.f32.xlu0 %v178
    %v180 = vpop.xlane.xlu0 %179
    %v181 = vsel %vm87, %v86, 0.0
    %182 = vadd.xlane.f32.xlu0 %v181
    %v183 = vpop.xlane.xlu0 %182
    %s184 = sld [smem:[#allocation2]]
    %v185 = vstv %s184
    %v186 = vadd.f32 %v90, %v185
    %v187 = vadd.f32 %v93, %v185
    %v188 = vadd.f32 %v96, %v185
    %v189 = vadd.f32 %v99, %v185
    %v190 = vadd.f32 %v102, %v185
    %v191 = vadd.f32 %v105, %v185
    %v192 = vadd.f32 %v108, %v185
    %v193 = vadd.f32 %v111, %v185
    %v194 = vadd.f32 %v114, %v185
    %v195 = vadd.f32 %v117, %v185
    %v196 = vadd.f32 %v120, %v185
    %v197 = vadd.f32 %v123, %v185
    %v198 = vadd.f32 %v126, %v185
    %v199 = vadd.f32 %v129, %v185
    %v200 = vadd.f32 %v132, %v185
    %v201 = vadd.f32 %v135, %v185
    %v202 = vadd.f32 %v138, %v185
    %v203 = vadd.f32 %v141, %v185
    %v204 = vadd.f32 %v144, %v185
    %v205 = vadd.f32 %v147, %v185
    %v206 = vadd.f32 %v150, %v185
    %v207 = vadd.f32 %v153, %v185
    %v208 = vadd.f32 %v156, %v185
    %v209 = vadd.f32 %v159, %v185
    %v210 = vadd.f32 %v162, %v185
    %v211 = vadd.f32 %v165, %v185
    %v212 = vadd.f32 %v168, %v185
    %v213 = vadd.f32 %v171, %v185
    %v214 = vadd.f32 %v174, %v185
    %v215 = vadd.f32 %v177, %v185
    %v216 = vadd.f32 %v180, %v185
    %v217 = vadd.f32 %v183, %v185
    %218 = vxpose.xlu0.b32.start [1/16] %v186, 128
    %219 = vxpose.xlu0.b32.cont [2/16] %v187, 128
    %220 = vxpose.xlu0.b32.cont [3/16] %v188, 128
    %221 = vxpose.xlu0.b32.cont [4/16] %v189, 128
    %222 = vxpose.xlu0.b32.cont [5/16] %v190, 128
    %223 = vxpose.xlu0.b32.cont [6/16] %v191, 128
    %224 = vxpose.xlu0.b32.cont [7/16] %v192, 128
    %225 = vxpose.xlu0.b32.cont [8/16] %v193, 128
    %226 = vxpose.xlu0.b32.cont [9/16] %v194, 128
    %227 = vxpose.xlu0.b32.cont [10/16] %v195, 128
    %228 = vxpose.xlu0.b32.cont [11/16] %v196, 128
    %229 = vxpose.xlu0.b32.cont [12/16] %v197, 128
    %230 = vxpose.xlu0.b32.cont [13/16] %v198, 128
    %231 = vxpose.xlu0.b32.cont [14/16] %v199, 128
    %232 = vxpose.xlu0.b32.cont [15/16] %v200, 128
    %233 = vxpose.xlu0.b32.end [16/16] %v201, 128
    %v234 = vpop.trf.xlu0
    %v235 = vpop.trf.xlu0
    %v236 = vpop.trf.xlu0
    %v237 = vpop.trf.xlu0
    %v238 = vpop.trf.xlu0
    %v239 = vpop.trf.xlu0
    %v240 = vpop.trf.xlu0
    %v241 = vpop.trf.xlu0
    %v242 = vpop.trf.xlu0
    %v243 = vpop.trf.xlu0
    %v244 = vpop.trf.xlu0
    %v245 = vpop.trf.xlu0
    %v246 = vpop.trf.xlu0
    %v247 = vpop.trf.xlu0
    %v248 = vpop.trf.xlu0
    %v249 = vpop.trf.xlu0
    %250 = vxpose.xlu0.b32.start [1/16] %v202, 128
    %251 = vxpose.xlu0.b32.cont [2/16] %v203, 128
    %252 = vxpose.xlu0.b32.cont [3/16] %v204, 128
    %253 = vxpose.xlu0.b32.cont [4/16] %v205, 128
    %254 = vxpose.xlu0.b32.cont [5/16] %v206, 128
    %255 = vxpose.xlu0.b32.cont [6/16] %v207, 128
    %256 = vxpose.xlu0.b32.cont [7/16] %v208, 128
    %257 = vxpose.xlu0.b32.cont [8/16] %v209, 128
    %258 = vxpose.xlu0.b32.cont [9/16] %v210, 128
    %259 = vxpose.xlu0.b32.cont [10/16] %v211, 128
    %260 = vxpose.xlu0.b32.cont [11/16] %v212, 128
    %261 = vxpose.xlu0.b32.cont [12/16] %v213, 128
    %262 = vxpose.xlu0.b32.cont [13/16] %v214, 128
    %263 = vxpose.xlu0.b32.cont [14/16] %v215, 128
    %264 = vxpose.xlu0.b32.cont [15/16] %v216, 128
    %265 = vxpose.xlu0.b32.end [16/16] %v217, 128
    %v266 = vpop.trf.xlu0
    %v267 = vpop.trf.xlu0
    %v268 = vpop.trf.xlu0
    %v269 = vpop.trf.xlu0
    %v270 = vpop.trf.xlu0
    %v271 = vpop.trf.xlu0
    %v272 = vpop.trf.xlu0
    %v273 = vpop.trf.xlu0
    %v274 = vpop.trf.xlu0
    %v275 = vpop.trf.xlu0
    %v276 = vpop.trf.xlu0
    %v277 = vpop.trf.xlu0
    %v278 = vpop.trf.xlu0
    %v279 = vpop.trf.xlu0
    %v280 = vpop.trf.xlu0
    %v281 = vpop.trf.xlu0
    %v284 = vcombine.low %v234, %v266
    %v286 = vunpack.c.l.s4 1966171168
    %v287 = vunpack.c.0.s8 %v286
    %v288 = vlaneseq
    %v289 = vshrl.u32 %v288, 7
    %v290 = vsub.s32 %v287, %v289
    %v291 = vrot.slane %v284, %v290
    %v293 = vunpack.c.l.s4 1966171168
    %v294 = vunpack.c.0.s8 %v293
    %v295 = vlaneseq
    %v296 = vshrl.u32 %v295, 7
    %v297 = vsub.s32 %v294, %v296
    %v298 = vrot.slane %v291, %v297
    %v300 = vlaneseq
    %vm301 = vcmp.ge.s32.totalorder %v300, 0
    %vm302 = vcmp.lt.s32.totalorder %v300, 256
    %vm303 = vmand %vm301, %vm302
    %304 = vst.msk [vmem:[#allocation3] sm:$0x3] %vm303, %v298
    // Predicated region
    $region14: #{tpu_custom_call.1} parent=1 // pred_check
      _
    $region15: #{tpu_custom_call.1} parent=1 // pred_check_branch
      %306 = sbr.rel (0) target = $region17
    $region16: #{tpu_custom_call.1} parent=1 // pred_region
      %s308 = ssub.s32 32, 32
      %309 = vsyncadd [#allocation4], %s308
      %s311 = sshll.u32 [#allocation3], 4
      %s312 = int_to_ptr.vmem [resolvable:$true] %s311
      %314 = dma.vmem_to_hbm [thread:$0]  %s312, 32, %s3, [#allocation4]
    $region17: #{tpu_custom_call.1} parent=1 // pred_fallthru
      _
    // Predicated region
    $region18: #{tpu_custom_call.1} parent=1 // pred_check
      _
    $region19: #{tpu_custom_call.1} parent=1 // pred_check_branch
      %316 = sbr.rel (0) target = $region21
    $region20: #{tpu_custom_call.1} parent=1 // pred_region
      %317 = dma.done [#allocation4], 32
    $region21: #{tpu_custom_call.1} parent=1 // pred_fallthru
      _
    %318 = vsyncpa [#allocation4], 1

</llo_original>
